<compile_context>
chip_gen: v5e
topology: v5e:2x2
jax: 0.10.0
libtpu: 0.0.40
codegen_flags: <defaults>
</compile_context>

<pallas_src>
import functools

import jax
import jax.numpy as jnp
import numpy as np
from jax import lax
from jax.experimental import pallas as pl
from jax.experimental.pallas import tpu as pltpu

_LANES = 128
_TWO_PI = float(2.0 * np.pi)
_DEG2RAD = float(np.pi / 180.0)


def _dual_angular_loss_kernel(pred_ref, target_ref, out_ref, *,
                              period, rows_total, tile_rows, mask_tail):
    """One (tile_rows, 128) tile -> one f32 partial sum of wrapped diff^2."""
    d = pred_ref[...] - target_ref[...]
    # Wrap into (-period/2, period/2]. Equal to atan2(sin, cos) (deg->rad
    # rescale folded into the final scalar) except for the sign chosen at
    # exactly +-period/2, which squaring removes.  Pure VPU (mul/round/sub);
    # no EUP transcendental chain.
    ang = d - jnp.float32(period) * jnp.round(d * jnp.float32(1.0 / period))
    sq = ang * ang
    if mask_tail:
        # Grid over-covers the array rows; zero out out-of-bounds rows.
        row0 = pl.program_id(0) * tile_rows
        rid = lax.broadcasted_iota(jnp.int32, sq.shape, 0) + row0
        sq = jnp.where(rid < rows_total, sq, jnp.float32(0.0))
    out_ref[0, 0] = jnp.sum(sq)


def _wrap_sq_mean(pred, target, period, scale_sq):
    """Plain-jnp path for tiny inputs (same math as the kernel)."""
    d = (pred - target).reshape(-1)
    ang = d - jnp.float32(period) * jnp.round(d * jnp.float32(1.0 / period))
    return jnp.mean(ang * ang) * jnp.float32(scale_sq)


def dual_angular_loss(pred, target, is_degrees=False, *, tile_rows=2048,
                      use_pallas=None, min_pallas_elements=65536):
    """Pallas equivalent of DualAngularLoss.forward.

    pred, target: (batch, 2) arrays of angles.  Returns a float32 scalar.
    use_pallas=None auto-dispatches: Pallas only above min_pallas_elements.
    """
    pred = jnp.asarray(pred, jnp.float32)
    target = jnp.asarray(target, jnp.float32)
    assert pred.shape == target.shape, (pred.shape, target.shape)

    n = int(np.prod(pred.shape))
    if n == 0:  # torch.mean of an empty tensor -> nan
        return jnp.float32(jnp.nan)

    period = 360.0 if is_degrees else _TWO_PI
    scale_sq = _DEG2RAD * _DEG2RAD if is_degrees else 1.0

    if use_pallas is None:
        # A standalone pallas_call is launch-overhead bound for the module's
        # nominal (batch, 2) sizes; only dispatch to it for large inputs.
        use_pallas = n >= int(min_pallas_elements)
    if not use_pallas:
        return _wrap_sq_mean(pred, target, period, scale_sq)

    flat_p = pred.reshape(-1)
    flat_t = target.reshape(-1)
    if n % _LANES != 0:
        # TODO(synk): ragged lane tail takes a small zero-pad copy; padded
        # elements give diff = 0 -> contribute 0, divisor stays the true n.
        pad = (-(-n // _LANES)) * _LANES - n
        flat_p = jnp.pad(flat_p, (0, pad))
        flat_t = jnp.pad(flat_t, (0, pad))
    rows = flat_p.shape[0] // _LANES
    p2 = flat_p.reshape(rows, _LANES)   # free, layout-preserving view
    t2 = flat_t.reshape(rows, _LANES)

    tr = max(8, (int(tile_rows) // 8) * 8)        # row tile: multiple of 8
    tr = min(tr, (-(-rows // 8)) * 8)             # no bigger than needed
    num_tiles = -(-rows // tr)                    # pl.cdiv; last tile may be partial
    mask_tail = (rows % tr) != 0

    kernel = functools.partial(
        _dual_angular_loss_kernel, period=float(period),
        rows_total=rows, tile_rows=tr, mask_tail=mask_tail)

    partials = pl.pallas_call(
        kernel,
        out_shape=jax.ShapeDtypeStruct((num_tiles, 1), jnp.float32),
        grid=(num_tiles,),
        in_specs=[
            pl.BlockSpec((tr, _LANES), lambda i: (i, 0)),
            pl.BlockSpec((tr, _LANES), lambda i: (i, 0)),
        ],
        out_specs=pl.BlockSpec((1, 1), lambda i: (i, 0),
                               memory_space=pltpu.MemorySpace.SMEM),
        compiler_params=pltpu.CompilerParams(
            # Per-tile partial sums are independent -> fully parallel axis
            # (megacore-shardable on v7x; harmless on v5e/v6e).
            dimension_semantics=("parallel",)),
    )(p2, t2)

    return jnp.sum(partials) * jnp.float32(scale_sq / n)


def _reference(pred, target, is_degrees=False):
    pred = jnp.asarray(pred, jnp.float32)
    target = jnp.asarray(target, jnp.float32)
    if is_degrees:
        pred = pred * (jnp.pi / 180.0)
        target = target * (jnp.pi / 180.0)
    d = pred - target
    ang = jnp.arctan2(jnp.sin(d), jnp.cos(d))
    return jnp.mean(ang ** 2)


if __name__ == "__main__":
    key = jax.random.PRNGKey(0)
    k = jax.random.split(key, 6)

    # 1) Nominal tiny (batch, 2) contract -> auto-dispatch takes the jnp path.
    pred_s = jax.random.uniform(k[0], (8, 2), jnp.float32,
                                -2.0 * np.pi, 2.0 * np.pi)
    targ_s = jax.random.uniform(k[1], (8, 2), jnp.float32,
                                -2.0 * np.pi, 2.0 * np.pi)
    loss_s = dual_angular_loss(pred_s, targ_s)
    jax.block_until_ready(loss_s)
    np.testing.assert_allclose(np.asarray(loss_s),
                               np.asarray(_reference(pred_s, targ_s)),
                               rtol=1e-4, atol=1e-5)

    # 2) Pallas path, copy-free aligned layout: batch=512 -> n=1024 -> 8 rows,
    #    single (8,128) tile, no tail mask.
    pred_a = jax.random.uniform(k[2], (512, 2), jnp.float32,
                                -4.0 * np.pi, 4.0 * np.pi)
    targ_a = jax.random.uniform(k[3], (512, 2), jnp.float32,
                                -4.0 * np.pi, 4.0 * np.pi)
    loss_a = dual_angular_loss(pred_a, targ_a, use_pallas=True)
    jax.block_until_ready(loss_a)
    np.testing.assert_allclose(np.asarray(loss_a),
                               np.asarray(_reference(pred_a, targ_a)),
                               rtol=1e-4, atol=1e-5)

    # 3) Pallas path, multi-tile grid with an over-covering masked last tile:
    #    batch=1280 -> n=2560 -> 20 rows; tile_rows=8 -> 3 tiles (last partial).
    pred_b = jax.random.uniform(k[4], (1280, 2), jnp.float32,
                                -4.0 * np.pi, 4.0 * np.pi)
    targ_b = jax.random.uniform(k[5], (1280, 2), jnp.float32,
                                -4.0 * np.pi, 4.0 * np.pi)
    loss_b = dual_angular_loss(pred_b, targ_b, use_pallas=True, tile_rows=8)
    jax.block_until_ready(loss_b)
    ref_b = _reference(pred_b, targ_b)
    np.testing.assert_allclose(np.asarray(loss_b), np.asarray(ref_b),
                               rtol=1e-4, atol=1e-5)

    # 4) Degrees path through the Pallas kernel (wrap with period 360, scale
    #    by (pi/180)^2 at the end), same data as (3).
    loss_deg = dual_angular_loss(pred_b * (180.0 / np.pi),
                                 targ_b * (180.0 / np.pi),
                                 is_degrees=True, use_pallas=True, tile_rows=8)
    jax.block_until_ready(loss_deg)
    np.testing.assert_allclose(np.asarray(loss_deg), np.asarray(ref_b),
                               rtol=1e-4, atol=1e-4)

    print("KERNEL_OK")
</pallas_src>

<mosaic_0001>
module attributes {stable_mosaic.version = 11 : i64} {
  func.func @_dual_angular_loss_kernel(%arg0: i32, %arg1: memref<8x128xf32, #tpu.memory_space<vmem>>, %arg2: memref<8x128xf32, #tpu.memory_space<vmem>>, %arg3: memref<1x1xf32, #tpu.memory_space<smem>>) attributes {dimension_semantics = [#tpu.dimension_semantics<parallel>], iteration_bounds = array<i64: 1>, scalar_prefetch = 0 : i64, scratch_operands = 0 : i64, tpu.core_type = #tpu.core_type<tc>, window_params = [{transform_indices = @transform_0, window_bounds = array<i64: 8, 128>}, {transform_indices = @transform_1, window_bounds = array<i64: 8, 128>}, {transform_indices = @transform_2, window_bounds = array<i64: 1, 1>}]} {
    %c0 = arith.constant 0 : index
    %c0_0 = arith.constant 0 : index
    %0 = vector.load %arg1[%c0, %c0_0] : memref<8x128xf32, #tpu.memory_space<vmem>>, vector<8x128xf32>
    %c0_1 = arith.constant 0 : index
    %c0_2 = arith.constant 0 : index
    %1 = vector.load %arg2[%c0_1, %c0_2] : memref<8x128xf32, #tpu.memory_space<vmem>>, vector<8x128xf32>
    %2 = arith.subf %0, %1 : vector<8x128xf32>
    %cst = arith.constant 0.159154937 : f32
    %3 = vector.broadcast %cst : f32 to vector<8x128xf32>
    %4 = arith.mulf %2, %3 : vector<8x128xf32>
    %5 = math.roundeven %4 : vector<8x128xf32>
    %cst_3 = arith.constant 6.28318548 : f32
    %6 = vector.broadcast %cst_3 : f32 to vector<8x128xf32>
    %7 = arith.mulf %6, %5 : vector<8x128xf32>
    %8 = arith.subf %2, %7 : vector<8x128xf32>
    %9 = arith.mulf %8, %8 : vector<8x128xf32>
    %10 = vector.shape_cast %9 : vector<8x128xf32> to vector<1x8x128xf32>
    %cst_4 = arith.constant dense<0.000000e+00> : vector<1xf32>
    %11 = vector.multi_reduction <add>, %10, %cst_4 [1, 2] : vector<1x8x128xf32> to vector<1xf32>
    %12 = vector.shape_cast %11 : vector<1xf32> to vector<1x1x1xf32>
    %13 = vector.extract %12[0, 0, 0] : f32 from vector<1x1x1xf32>
    %c0_5 = arith.constant 0 : index
    %c0_6 = arith.constant 0 : index
    %14 = memref.load %arg3[%c0_5, %c0_6] : memref<1x1xf32, #tpu.memory_space<smem>>
    memref.store %13, %arg3[%c0_5, %c0_6] : memref<1x1xf32, #tpu.memory_space<smem>>
    return
  }
  func.func @transform_0(%arg0: i32) -> (i32, i32) {
    %c0_i32 = arith.constant 0 : i32
    %c0_i32_0 = arith.constant 0 : i32
    return %arg0, %c0_i32 : i32, i32
  }
  func.func @transform_1(%arg0: i32) -> (i32, i32) {
    %c0_i32 = arith.constant 0 : i32
    %c0_i32_0 = arith.constant 0 : i32
    return %arg0, %c0_i32 : i32, i32
  }
  func.func @transform_2(%arg0: i32) -> (i32, i32) {
    %c0_i32 = arith.constant 0 : i32
    %c0_i32_0 = arith.constant 0 : i32
    return %arg0, %c0_i32 : i32, i32
  }
}

</mosaic_0001>

<llo_original>
// kernel: tpu_custom_call.1
$region0: #{tpu_custom_call.1}
  #allocation0 [shape = 'u32[]', space=smem, size = 0x4, offset = 0x4, fixed_abs, tag = 'smem constant byte address 0x4 - core index']
  #allocation1 [shape = 'u32[72,128]{1,0:T(1,128)}', space=vmem, size = 0x9000, scoped, tag = 'internal scratch']
  %s0 = inlined_call_operand.hbm [shape: f32[8,128], index: 0, kind: input, shape index: {}]
  %s1 = inlined_call_operand.hbm [shape: f32[8,128], index: 1, kind: input, shape index: {}]
  %s2 = inlined_call_operand.hbm [shape: f32[1,1], index: 2, kind: output, shape index: {}]
  %s3 = sld [smem:[#allocation0]]
  $region26: #{tpu_custom_call.1} parent=0
    _
  %s5 = ssub.s32 1, %s3
  %s6 = scalar_select 0, %s5, %s3
  $region1: #{tpu_custom_call.1} parent=0
    #allocation2 [shape = 'u8[4096]{0}', space=vmem, size = 0x1000, scoped, tag = 'input window, operand 0, single buffered']
    #allocation3 [shape = 's32[1]{0}', space=sflag, size = 0x4, scoped, tag = 'scoped memory for tpu_custom_call.1']
    #allocation4 [shape = 's32[1]{0}', space=sflag, size = 0x4, scoped, tag = 'scoped memory for tpu_custom_call.1']
    #allocation5 [shape = 'u8[4096]{0}', space=vmem, size = 0x1000, scoped, tag = 'input window, operand 1, single buffered']
    #allocation6 [shape = 's32[1]{0}', space=sflag, size = 0x4, scoped, tag = 'scoped memory for tpu_custom_call.1']
    #allocation7 [shape = 'u8[512]{0}', space=smem, size = 0x200, scoped, tag = 'output window, operand 0, single buffered']
    %7 = vsyncpa [#allocation3], 0
    %8 = vsyncpa [#allocation6], 0
    %9 = vsyncpa [#allocation4], 0
    // Predicated region
    $region2: #{tpu_custom_call.1} parent=1 // pred_check
      _
    $region3: #{tpu_custom_call.1} parent=1 // pred_check_branch
      %11 = sbr.rel (0) target = $region5
    $region4: #{tpu_custom_call.1} parent=1 // pred_region
      %13 = vsyncadd [#allocation3], 0
      %s15 = sshll.u32 %s0, 4
      %s16 = int_to_ptr.hbm [resolvable:$true] %s15
      %s17 = sshll.u32 [#allocation2], 4
      %s18 = int_to_ptr.vmem [resolvable:$true] %s17
      %20 = dma.hbm_to_vmem [thread:$0]  %s16, 128, %s18, [#allocation3]
    $region5: #{tpu_custom_call.1} parent=1 // pred_fallthru
      _
    // Predicated region
    $region6: #{tpu_custom_call.1} parent=1 // pred_check
      _
    $region7: #{tpu_custom_call.1} parent=1 // pred_check_branch
      %22 = sbr.rel (0) target = $region9
    $region8: #{tpu_custom_call.1} parent=1 // pred_region
      %24 = vsyncadd [#allocation6], 0
      %s26 = sshll.u32 %s1, 4
      %s27 = int_to_ptr.hbm [resolvable:$true] %s26
      %s28 = sshll.u32 [#allocation5], 4
      %s29 = int_to_ptr.vmem [resolvable:$true] %s28
      %31 = dma.hbm_to_vmem [thread:$0]  %s27, 128, %s29, [#allocation6]
    $region9: #{tpu_custom_call.1} parent=1 // pred_fallthru
      _
    // Predicated region
    $region10: #{tpu_custom_call.1} parent=1 // pred_check
      _
    $region11: #{tpu_custom_call.1} parent=1 // pred_check_branch
      %33 = sbr.rel (0) target = $region13
    $region12: #{tpu_custom_call.1} parent=1 // pred_region
      %35 = dma.done [#allocation3], 128
    $region13: #{tpu_custom_call.1} parent=1 // pred_fallthru
      _
    // Predicated region
    $region14: #{tpu_custom_call.1} parent=1 // pred_check
      _
    $region15: #{tpu_custom_call.1} parent=1 // pred_check_branch
      %37 = sbr.rel (0) target = $region17
    $region16: #{tpu_custom_call.1} parent=1 // pred_region
      %39 = dma.done [#allocation6], 128
    $region17: #{tpu_custom_call.1} parent=1 // pred_fallthru
      _
    %v40 = vld [vmem:[#allocation2] sm:$0xff]
    %v41 = vld [vmem:[#allocation5] sm:$0xff]
    %v42 = vsub.f32 %v40, %v41
    %v43 = vmul.f32 %v42, 0.15915494
    %v44 = vround.ne.pseudo %v43
    %v45 = vmul.f32 %v44, 6.2831855
    %v46 = vsub.f32 %v42, %v45
    %v47 = vmul.f32 %v46, %v46
    %48 = vadd.xlane.f32.xlu0 %v47
    %v49 = vpop.xlane.xlu0 %48
    %v50 = vrot.slane %v49, 4
    %v51 = vadd.f32 %v49, %v50
    %v52 = vrot.slane %v51, 2
    %v53 = vadd.f32 %v51, %v52
    %v54 = vrot.slane %v53, 1
    %v55 = vadd.f32 %v53, %v54
    %s56 = vtos %v55
    %s57 = scalar_lea.smem [#allocation7], 0
    %58 = sst [smem:[%s57]] %s56
    // Predicated region
    $region18: #{tpu_custom_call.1} parent=1 // pred_check
      _
    $region19: #{tpu_custom_call.1} parent=1 // pred_check_branch
      %60 = sbr.rel (0) target = $region21
    $region20: #{tpu_custom_call.1} parent=1 // pred_region
      %62 = vsyncadd [#allocation4], 0
      %s64 = sshll.u32 %s2, 4
      %s65 = int_to_ptr.hbm [resolvable:$true] %s64
      %67 = dma.smem_to_hbm [#allocation7], 16, %s65, [#allocation4]
    $region21: #{tpu_custom_call.1} parent=1 // pred_fallthru
      _
    // Predicated region
    $region22: #{tpu_custom_call.1} parent=1 // pred_check
      _
    $region23: #{tpu_custom_call.1} parent=1 // pred_check_branch
      %69 = sbr.rel (0) target = $region25
    $region24: #{tpu_custom_call.1} parent=1 // pred_region
      %71 = dma.done [#allocation4], 16
    $region25: #{tpu_custom_call.1} parent=1 // pred_fallthru
      _
    %72 = sfence
    %73 = vsyncpa [#allocation3], 1
    %74 = vsyncpa [#allocation6], 1
    %75 = vsyncpa [#allocation4], 1

</llo_original>
